<compile_context>
chip_gen: v7x
topology: tpu7x:2x2x1
jax: 0.10.0
libtpu: 0.0.40
codegen_flags: <defaults>
</compile_context>

<pallas_src>
import math

import jax
import jax.numpy as jnp
from jax.experimental import pallas as pl
from jax.experimental.pallas import tpu as pltpu

LANE = 128
SUBLANE = 8


def simplenet_kernel(x_ref, w1_ref, b1_ref, w2_ref, b2_ref, o_ref):
    # x_ref:  (tm, D_in)   batch tile (last dim = full D_in extent)
    # w1_ref: (D_in, H)    H = 4, resident (constant index_map)
    # b1_ref: (1, H)
    # w2_ref: (H, N_pad)   N_pad = D_out padded up to a multiple of 128
    # b2_ref: (1, N_pad)
    # o_ref:  (tm, N_pad)  lane-dense output tile -> unmasked vector stores
    x = x_ref[...]

    # Layer 1 on the MXU (the only real contraction, over D_in).
    h = jnp.dot(x, w1_ref[...], preferred_element_type=jnp.float32) + b1_ref[...]
    # LeakyReLU (PyTorch default negative_slope = 0.01).
    h = jnp.where(h > 0, h, 0.01 * h)

    # Layer 2: K=4, N=D_out is far below MXU native size, so do it on the VPU
    # as 4 broadcast FMAs (static loop -> fully unrolled).
    w2 = w2_ref[...]
    out = jnp.broadcast_to(b2_ref[...], o_ref.shape).astype(jnp.float32)
    for k in range(w2_ref.shape[0]):
        out = out + h[:, k:k + 1] * w2[k:k + 1, :]

    o_ref[...] = out.astype(o_ref.dtype)


def _round_up(n, m):
    return ((n + m - 1) // m) * m


def simplenet_forward(x, w1, b1, w2, b2, *, tm=None):
    """leaky_relu(x @ w1 + b1) @ w2 + b2, streamed over the batch dimension."""
    B, D_in = x.shape
    H = w1.shape[1]
    D_out = w2.shape[1]

    # Lane-dense output: pad D_out (and w2/b2 columns) up to a multiple of 128.
    N_pad = _round_up(D_out, LANE)
    if N_pad != D_out:
        w2 = jnp.pad(w2, ((0, 0), (0, N_pad - D_out)))
        b2 = jnp.pad(b2, ((0, 0), (0, N_pad - D_out)))

    # Choose the batch tile: as big as a ~24 MiB double-buffer budget allows
    # (headroom for v7x: 64 MiB physical / 32 MiB default-scoped VMEM), rounded
    # to the sublane multiple.  For small batches, split into >=2 grid steps
    # when possible so both v7x TensorCores are fed.
    B8 = _round_up(B, SUBLANE)
    if tm is None:
        row_bytes = 2 * (D_in + N_pad) * 4          # double-buffered f32 rows
        budget = 24 * 1024 * 1024
        tm = min(4096, max(SUBLANE, (budget // row_bytes) // SUBLANE * SUBLANE))
        if B8 <= tm:
            if B8 >= 2 * SUBLANE:
                tm = max(SUBLANE, (B8 // 2) // SUBLANE * SUBLANE)
            else:
                tm = B8
    B_pad = _round_up(B8, tm)
    if B_pad != B:
        x = jnp.pad(x, ((0, B_pad - B), (0, 0)))

    grid = (B_pad // tm,)

    # Explicit VMEM limit with headroom: double-buffered x/out tiles + the
    # resident weights (constant index_maps keep w1/b1/w2/b2 in VMEM across
    # the whole grid).
    dbuf_bytes = 2 * tm * (D_in + N_pad) * 4
    resident_bytes = (D_in * H + H + H * N_pad + N_pad) * 4
    vmem_limit = max(dbuf_bytes + resident_bytes + (8 << 20), 16 << 20)

    out = pl.pallas_call(
        simplenet_kernel,
        out_shape=jax.ShapeDtypeStruct((B_pad, N_pad), jnp.float32),
        grid_spec=pltpu.PrefetchScalarGridSpec(
            num_scalar_prefetch=0,
            grid=grid,
            in_specs=[
                pl.BlockSpec((tm, D_in), lambda i: (i, 0)),    # batch-tiled input
                pl.BlockSpec((D_in, H), lambda i: (0, 0)),     # resident weight 1
                pl.BlockSpec((1, H), lambda i: (0, 0)),        # resident bias 1
                pl.BlockSpec((H, N_pad), lambda i: (0, 0)),    # resident weight 2 (padded)
                pl.BlockSpec((1, N_pad), lambda i: (0, 0)),    # resident bias 2 (padded)
            ],
            out_specs=pl.BlockSpec((tm, N_pad), lambda i: (i, 0)),
        ),
        compiler_params=pltpu.CompilerParams(
            dimension_semantics=("parallel",),
            vmem_limit_bytes=vmem_limit,
        ),
    )(x, w1, b1, w2, b2)

    # Drop batch padding and the zero-padded output lanes.
    return out[:B, :D_out]


def init_params(key, input_dimensions, hidden, output_dimensions):
    """Deterministic init mimicking torch.nn.Linear defaults: U(-1/sqrt(fan_in), 1/sqrt(fan_in))."""
    k1, k2, k3, k4 = jax.random.split(key, 4)
    lim1 = 1.0 / math.sqrt(input_dimensions)
    lim2 = 1.0 / math.sqrt(hidden)
    # Stored as (in_features, out_features) so the kernel can do x @ W directly.
    w1 = jax.random.uniform(k1, (input_dimensions, hidden), jnp.float32, -lim1, lim1)
    b1 = jax.random.uniform(k2, (1, hidden), jnp.float32, -lim1, lim1)
    w2 = jax.random.uniform(k3, (hidden, output_dimensions), jnp.float32, -lim2, lim2)
    b2 = jax.random.uniform(k4, (1, output_dimensions), jnp.float32, -lim2, lim2)
    return w1, b1, w2, b2


if __name__ == "__main__":
    input_dimensions = 32
    hidden = 4            # fixed by the module definition
    output_dimensions = 8

    key = jax.random.PRNGKey(0)
    k_params, k_x1, k_x2 = jax.random.split(key, 3)
    w1, b1, w2, b2 = init_params(k_params, input_dimensions, hidden, output_dimensions)

    def reference(x):
        h = x @ w1 + b1
        h = jnp.where(h > 0, h, 0.01 * h)
        return h @ w2 + b2

    # Small, non-multiple-of-8 batch -> exercises wrapper padding / tail handling.
    x_small = jax.random.normal(k_x1, (10, input_dimensions), jnp.float32)
    out_small = jax.block_until_ready(simplenet_forward(x_small, w1, b1, w2, b2))
    assert out_small.shape == (10, output_dimensions)
    assert jnp.allclose(out_small, reference(x_small), atol=1e-5, rtol=1e-5)

    # Moderately larger batch -> multi-step grid path (2 tiles, "parallel" axis).
    x_big = jax.random.normal(k_x2, (256, input_dimensions), jnp.float32)
    out_big = jax.block_until_ready(simplenet_forward(x_big, w1, b1, w2, b2))
    assert out_big.shape == (256, output_dimensions)
    assert jnp.allclose(out_big, reference(x_big), atol=1e-5, rtol=1e-5)

    print("KERNEL_OK")
</pallas_src>

<mosaic_0001>
module attributes {stable_mosaic.version = 11 : i64} {
  func.func @simplenet_kernel(%arg0: i32, %arg1: memref<8x32xf32, #tpu.memory_space<vmem>>, %arg2: memref<32x4xf32, #tpu.memory_space<vmem>>, %arg3: memref<1x4xf32, #tpu.memory_space<vmem>>, %arg4: memref<4x128xf32, #tpu.memory_space<vmem>>, %arg5: memref<1x128xf32, #tpu.memory_space<vmem>>, %arg6: memref<8x128xf32, #tpu.memory_space<vmem>>) attributes {dimension_semantics = [#tpu.dimension_semantics<parallel>], iteration_bounds = array<i64: 2>, scalar_prefetch = 0 : i64, scratch_operands = 0 : i64, tpu.core_type = #tpu.core_type<tc>, window_params = [{transform_indices = @transform_0, window_bounds = array<i64: 8, 32>}, {pipeline_mode = #tpu.pipeline_mode<synchronous>, transform_indices = @transform_1, window_bounds = array<i64: 32, 4>}, {pipeline_mode = #tpu.pipeline_mode<synchronous>, transform_indices = @transform_2, window_bounds = array<i64: 1, 4>}, {pipeline_mode = #tpu.pipeline_mode<synchronous>, transform_indices = @transform_3, window_bounds = array<i64: 4, 128>}, {pipeline_mode = #tpu.pipeline_mode<synchronous>, transform_indices = @transform_4, window_bounds = array<i64: 1, 128>}, {transform_indices = @transform_5, window_bounds = array<i64: 8, 128>}]} {
    %c0 = arith.constant 0 : index
    %c0_0 = arith.constant 0 : index
    %0 = vector.load %arg1[%c0, %c0_0] : memref<8x32xf32, #tpu.memory_space<vmem>>, vector<8x32xf32>
    %c0_1 = arith.constant 0 : index
    %c0_2 = arith.constant 0 : index
    %1 = vector.load %arg2[%c0_1, %c0_2] : memref<32x4xf32, #tpu.memory_space<vmem>>, vector<32x4xf32>
    %cst = arith.constant dense<0.000000e+00> : vector<8x4xf32>
    %2 = tpu.matmul %0, %1, %cst {dimension_numbers = #tpu.dot_dimension_numbers<[1], [0], [0], [1], [0, 0, 1, 1], [], []>} : vector<8x32xf32>, vector<32x4xf32>, vector<8x4xf32> -> vector<8x4xf32>
    %c0_3 = arith.constant 0 : index
    %c0_4 = arith.constant 0 : index
    %3 = vector.load %arg3[%c0_3, %c0_4] : memref<1x4xf32, #tpu.memory_space<vmem>>, vector<1x4xf32>
    %4 = vector.broadcast %3 : vector<1x4xf32> to vector<8x4xf32>
    %5 = arith.addf %2, %4 : vector<8x4xf32>
    %cst_5 = arith.constant 0.000000e+00 : f32
    %6 = vector.broadcast %cst_5 : f32 to vector<8x4xf32>
    %7 = arith.cmpf ogt, %5, %6 : vector<8x4xf32>
    %cst_6 = arith.constant 0.00999999977 : f32
    %8 = vector.broadcast %cst_6 : f32 to vector<8x4xf32>
    %9 = arith.mulf %8, %5 : vector<8x4xf32>
    %10 = arith.select %7, %5, %9 : vector<8x4xi1>, vector<8x4xf32>
    %c0_7 = arith.constant 0 : index
    %c0_8 = arith.constant 0 : index
    %11 = vector.load %arg4[%c0_7, %c0_8] : memref<4x128xf32, #tpu.memory_space<vmem>>, vector<4x128xf32>
    %c0_9 = arith.constant 0 : index
    %c0_10 = arith.constant 0 : index
    %12 = vector.load %arg5[%c0_9, %c0_10] : memref<1x128xf32, #tpu.memory_space<vmem>>, vector<1x128xf32>
    %13 = vector.shape_cast %12 : vector<1x128xf32> to vector<1x128xf32>
    %14 = vector.broadcast %13 : vector<1x128xf32> to vector<8x128xf32>
    %15 = vector.extract_strided_slice %10 {offsets = [0, 0], sizes = [8, 1], strides = [1, 1]} : vector<8x4xf32> to vector<8x1xf32>
    %16 = vector.extract_strided_slice %11 {offsets = [0, 0], sizes = [1, 128], strides = [1, 1]} : vector<4x128xf32> to vector<1x128xf32>
    %17 = vector.broadcast %15 : vector<8x1xf32> to vector<8x128xf32>
    %18 = vector.broadcast %16 : vector<1x128xf32> to vector<8x128xf32>
    %19 = arith.mulf %17, %18 : vector<8x128xf32>
    %20 = arith.addf %14, %19 : vector<8x128xf32>
    %21 = vector.extract_strided_slice %10 {offsets = [0, 1], sizes = [8, 1], strides = [1, 1]} : vector<8x4xf32> to vector<8x1xf32>
    %22 = vector.extract_strided_slice %11 {offsets = [1, 0], sizes = [1, 128], strides = [1, 1]} : vector<4x128xf32> to vector<1x128xf32>
    %23 = vector.broadcast %21 : vector<8x1xf32> to vector<8x128xf32>
    %24 = vector.broadcast %22 : vector<1x128xf32> to vector<8x128xf32>
    %25 = arith.mulf %23, %24 : vector<8x128xf32>
    %26 = arith.addf %20, %25 : vector<8x128xf32>
    %27 = vector.extract_strided_slice %10 {offsets = [0, 2], sizes = [8, 1], strides = [1, 1]} : vector<8x4xf32> to vector<8x1xf32>
    %28 = vector.extract_strided_slice %11 {offsets = [2, 0], sizes = [1, 128], strides = [1, 1]} : vector<4x128xf32> to vector<1x128xf32>
    %29 = vector.broadcast %27 : vector<8x1xf32> to vector<8x128xf32>
    %30 = vector.broadcast %28 : vector<1x128xf32> to vector<8x128xf32>
    %31 = arith.mulf %29, %30 : vector<8x128xf32>
    %32 = arith.addf %26, %31 : vector<8x128xf32>
    %33 = vector.extract_strided_slice %10 {offsets = [0, 3], sizes = [8, 1], strides = [1, 1]} : vector<8x4xf32> to vector<8x1xf32>
    %34 = vector.extract_strided_slice %11 {offsets = [3, 0], sizes = [1, 128], strides = [1, 1]} : vector<4x128xf32> to vector<1x128xf32>
    %35 = vector.broadcast %33 : vector<8x1xf32> to vector<8x128xf32>
    %36 = vector.broadcast %34 : vector<1x128xf32> to vector<8x128xf32>
    %37 = arith.mulf %35, %36 : vector<8x128xf32>
    %38 = arith.addf %32, %37 : vector<8x128xf32>
    %c0_11 = arith.constant 0 : index
    %c0_12 = arith.constant 0 : index
    %39 = vector.load %arg6[%c0_11, %c0_12] : memref<8x128xf32, #tpu.memory_space<vmem>>, vector<8x128xf32>
    tpu.vector_store %arg6[%c0_11, %c0_12], %38 {strides = array<i32>} : memref<8x128xf32, #tpu.memory_space<vmem>>, vector<8x128xf32>,
    return
  }
  func.func @transform_0(%arg0: i32) -> (i32, i32) {
    %c0_i32 = arith.constant 0 : i32
    %c0_i32_0 = arith.constant 0 : i32
    return %arg0, %c0_i32 : i32, i32
  }
  func.func @transform_1(%arg0: i32) -> (i32, i32) {
    %c0_i32 = arith.constant 0 : i32
    %c0_i32_0 = arith.constant 0 : i32
    %c0_i32_1 = arith.constant 0 : i32
    return %c0_i32, %c0_i32_0 : i32, i32
  }
  func.func @transform_2(%arg0: i32) -> (i32, i32) {
    %c0_i32 = arith.constant 0 : i32
    %c0_i32_0 = arith.constant 0 : i32
    %c0_i32_1 = arith.constant 0 : i32
    return %c0_i32, %c0_i32_0 : i32, i32
  }
  func.func @transform_3(%arg0: i32) -> (i32, i32) {
    %c0_i32 = arith.constant 0 : i32
    %c0_i32_0 = arith.constant 0 : i32
    %c0_i32_1 = arith.constant 0 : i32
    return %c0_i32, %c0_i32_0 : i32, i32
  }
  func.func @transform_4(%arg0: i32) -> (i32, i32) {
    %c0_i32 = arith.constant 0 : i32
    %c0_i32_0 = arith.constant 0 : i32
    %c0_i32_1 = arith.constant 0 : i32
    return %c0_i32, %c0_i32_0 : i32, i32
  }
  func.func @transform_5(%arg0: i32) -> (i32, i32) {
    %c0_i32 = arith.constant 0 : i32
    %c0_i32_0 = arith.constant 0 : i32
    return %arg0, %c0_i32 : i32, i32
  }
}

</mosaic_0001>

<llo_original>
// kernel: tpu_custom_call.1
$region0: #{tpu_custom_call.1}
  #allocation0 [shape = 'u32[]', space=smem, size = 0x4, offset = 0x4, fixed_abs, tag = 'smem constant byte address 0x4 - core index']
  #allocation1 [shape = 'u32[144,128]{1,0:T(1,128)}', space=vmem, size = 0x12000, scoped, tag = 'internal scratch']
  %s0 = inlined_call_operand.vmem [shape: f32[16,32], index: 0, kind: input, shape index: {}]
  %s1 = inlined_call_operand.vmem [shape: f32[32,4], index: 1, kind: input, shape index: {}]
  %s2 = inlined_call_operand.vmem [shape: f32[1,4], index: 2, kind: input, shape index: {}]
  %s3 = inlined_call_operand.vmem [shape: f32[4,128], index: 3, kind: input, shape index: {}]
  %s4 = inlined_call_operand.vmem [shape: f32[1,128], index: 4, kind: input, shape index: {}]
  %s5 = inlined_call_operand.hbm [shape: f32[16,128], index: 5, kind: output, shape index: {}]
  %s6 = sld [smem:[#allocation0]]
  $region53: #{tpu_custom_call.1} parent=0
    _
  %s8 = ssub.s32 1, %s6
  %s9 = scalar_select 0, %s8, %s6
  $region1: #{tpu_custom_call.1} parent=0
    #allocation2 [shape = 'u8[8192]{0}', space=vmem, size = 0x2000, scoped, tag = 'output window, operand 0']
    #allocation3 [shape = 's32[2]{0}', space=sflag, size = 0x8, scoped, tag = 'scoped memory for tpu_custom_call.1']
    %10 = vsyncpa [#allocation3], 0
    %s11 = scalar_lea.sflag [#allocation3], 1
    %12 = vsyncpa %s11, 0
    loop: start=0, step=1, limit=4
    $region2: #{tpu_custom_call.1} parent=1 // loop_pre_header
      _
    $region3: #{tpu_custom_call.1} parent=1 // loop_header
      %s14 = sphi 0, %s18
      %p15 = scmp.ge.s32.totalorder %s14, 4
      %s24 = sphi 0, %s26
      %s27 = sphi 0, %s24
      %s28 = sphi 0, %s27
      %s44 = sphi 0, %s28
      %s48 = sphi 0, %s48
      %s50 = sphi 0, %s48
      %s51 = sphi 0, %s50
      %s65 = sphi 0, %s51
      %s69 = sphi 0, %s69
      %s71 = sphi 0, %s69
      %s72 = sphi 0, %s71
      %s86 = sphi 0, %s72
      %s90 = sphi 0, %s90
      %s92 = sphi 0, %s90
      %s93 = sphi 0, %s92
      %s107 = sphi 0, %s93
      %s111 = sphi 0, %s111
      %s113 = sphi 0, %s111
      %s114 = sphi 0, %s113
      %s128 = sphi 0, %s114
      %s134 = sphi 0, %s136
      %s137 = sphi 0, %s134
      %s138 = sphi 0, %s137
      %s154 = sphi 0, %s138
    $region4: #{tpu_custom_call.1} parent=1 // loop_header_branch
      %17 = sbr.rel (%p15) target = $region8
    $region5: #{tpu_custom_call.1} parent=1 // loop_body
      %s19 = ssub.s32 %s14, 1
      %s20 = ssub.s32 %s14, 2
      %s21 = sadd.s32 %s14, 1
      %s22 = ssub.s32 %s14, %s21
      %p23 = scmp.eq.s32.totalorder %s22, 0
      %s25 = sadd.s32 %s24, 1
      %s26 = scalar_select %p23, %s24, %s25
      %p29 = pneg %p23
      %p30 = scmp.eq.s32.totalorder %s14, 1
      %p31 = por %p29, %p30
      %p32 = scmp.ne.s32.totalorder %s24, %s27
      %p33 = scmp.eq.s32.totalorder %s14, 0
      %p34 = por %p32, %p33
      %p35 = scmp.ne.s32.totalorder %s24, %s27
      %p36 = scmp.eq.s32.totalorder %s19, 1
      %p37 = por %p35, %p36
      %p38 = scmp.ne.s32.totalorder %s27, %s28
      %p39 = scmp.eq.s32.totalorder %s19, 0
      %p40 = por %p38, %p39
      %p41 = scmp.ne.s32.totalorder %s27, %s28
      %p42 = scmp.eq.s32.totalorder %s20, 1
      %p43 = por %p41, %p42
      %p45 = scmp.ne.s32.totalorder %s28, %s44
      %p46 = scmp.eq.s32.totalorder %s20, 0
      %p47 = por %p45, %p46
      %s49 = sadd.s32 %s48, 1
      %p52 = scmp.eq.s32.totalorder %s14, 1
      %p53 = scmp.ne.s32.totalorder %s48, %s50
      %p54 = scmp.eq.s32.totalorder %s14, 0
      %p55 = por %p53, %p54
      %p56 = scmp.ne.s32.totalorder %s48, %s50
      %p57 = scmp.eq.s32.totalorder %s19, 1
      %p58 = por %p56, %p57
      %p59 = scmp.ne.s32.totalorder %s50, %s51
      %p60 = scmp.eq.s32.totalorder %s19, 0
      %p61 = por %p59, %p60
      %p62 = scmp.ne.s32.totalorder %s50, %s51
      %p63 = scmp.eq.s32.totalorder %s20, 1
      %p64 = por %p62, %p63
      %p66 = scmp.ne.s32.totalorder %s51, %s65
      %p67 = scmp.eq.s32.totalorder %s20, 0
      %p68 = por %p66, %p67
      %s70 = sadd.s32 %s69, 1
      %p73 = scmp.eq.s32.totalorder %s14, 1
      %p74 = scmp.ne.s32.totalorder %s69, %s71
      %p75 = scmp.eq.s32.totalorder %s14, 0
      %p76 = por %p74, %p75
      %p77 = scmp.ne.s32.totalorder %s69, %s71
      %p78 = scmp.eq.s32.totalorder %s19, 1
      %p79 = por %p77, %p78
      %p80 = scmp.ne.s32.totalorder %s71, %s72
      %p81 = scmp.eq.s32.totalorder %s19, 0
      %p82 = por %p80, %p81
      %p83 = scmp.ne.s32.totalorder %s71, %s72
      %p84 = scmp.eq.s32.totalorder %s20, 1
      %p85 = por %p83, %p84
      %p87 = scmp.ne.s32.totalorder %s72, %s86
      %p88 = scmp.eq.s32.totalorder %s20, 0
      %p89 = por %p87, %p88
      %s91 = sadd.s32 %s90, 1
      %p94 = scmp.eq.s32.totalorder %s14, 1
      %p95 = scmp.ne.s32.totalorder %s90, %s92
      %p96 = scmp.eq.s32.totalorder %s14, 0
      %p97 = por %p95, %p96
      %p98 = scmp.ne.s32.totalorder %s90, %s92
      %p99 = scmp.eq.s32.totalorder %s19, 1
      %p100 = por %p98, %p99
      %p101 = scmp.ne.s32.totalorder %s92, %s93
      %p102 = scmp.eq.s32.totalorder %s19, 0
      %p103 = por %p101, %p102
      %p104 = scmp.ne.s32.totalorder %s92, %s93
      %p105 = scmp.eq.s32.totalorder %s20, 1
      %p106 = por %p104, %p105
      %p108 = scmp.ne.s32.totalorder %s93, %s107
      %p109 = scmp.eq.s32.totalorder %s20, 0
      %p110 = por %p108, %p109
      %s112 = sadd.s32 %s111, 1
      %p115 = scmp.eq.s32.totalorder %s14, 1
      %p116 = scmp.ne.s32.totalorder %s111, %s113
      %p117 = scmp.eq.s32.totalorder %s14, 0
      %p118 = por %p116, %p117
      %p119 = scmp.ne.s32.totalorder %s111, %s113
      %p120 = scmp.eq.s32.totalorder %s19, 1
      %p121 = por %p119, %p120
      %p122 = scmp.ne.s32.totalorder %s113, %s114
      %p123 = scmp.eq.s32.totalorder %s19, 0
      %p124 = por %p122, %p123
      %p125 = scmp.ne.s32.totalorder %s113, %s114
      %p126 = scmp.eq.s32.totalorder %s20, 1
      %p127 = por %p125, %p126
      %p129 = scmp.ne.s32.totalorder %s114, %s128
      %p130 = scmp.eq.s32.totalorder %s20, 0
      %p131 = por %p129, %p130
      %s132 = ssub.s32 %s14, %s21
      %p133 = scmp.eq.s32.totalorder %s132, 0
      %s135 = sadd.s32 %s134, 1
      %s136 = scalar_select %p133, %s134, %s135
      %p139 = pneg %p133
      %p140 = scmp.eq.s32.totalorder %s14, 1
      %p141 = por %p139, %p140
      %p142 = scmp.ne.s32.totalorder %s134, %s137
      %p143 = scmp.eq.s32.totalorder %s14, 0
      %p144 = por %p142, %p143
      %p145 = scmp.ne.s32.totalorder %s134, %s137
      %p146 = scmp.eq.s32.totalorder %s19, 1
      %p147 = por %p145, %p146
      %p148 = scmp.ne.s32.totalorder %s137, %s138
      %p149 = scmp.eq.s32.totalorder %s19, 0
      %p150 = por %p148, %p149
      %p151 = scmp.ne.s32.totalorder %s137, %s138
      %p152 = scmp.eq.s32.totalorder %s20, 1
      %p153 = por %p151, %p152
      %p155 = scmp.ne.s32.totalorder %s138, %s154
      %p156 = scmp.eq.s32.totalorder %s20, 0
      %p157 = por %p155, %p156
      %p158 = scmp.le.s32.totalorder 1, %s14
      %p159 = scmp.lt.s32.totalorder %s14, 3
      %p160 = pnand %p158, %p159
      %p161 = pneg %p160
      // Predicated region
      $region9: #{tpu_custom_call.1} parent=5 // pred_check
        _
      $region10: #{tpu_custom_call.1} parent=5 // pred_check_branch
        %163 = sbr.rel (%p160) target = $region12
      $region11: #{tpu_custom_call.1} parent=5 // pred_region
        %s164 = ssub.s32 %s14, 1
        // Predicated region
        $region13: #{tpu_custom_call.1} parent=11 // pred_check
          %p165 = pneg %p61
        $region14: #{tpu_custom_call.1} parent=11 // pred_check_branch
          %167 = sbr.rel (%p165) target = $region16
        $region15: #{tpu_custom_call.1} parent=11 // pred_region
          _
        $region16: #{tpu_custom_call.1} parent=11 // pred_fallthru
          _
        // Predicated region
        $region17: #{tpu_custom_call.1} parent=11 // pred_check
          %p168 = pneg %p82
        $region18: #{tpu_custom_call.1} parent=11 // pred_check_branch
          %170 = sbr.rel (%p168) target = $region20
        $region19: #{tpu_custom_call.1} parent=11 // pred_region
          _
        $region20: #{tpu_custom_call.1} parent=11 // pred_fallthru
          _
        // Predicated region
        $region21: #{tpu_custom_call.1} parent=11 // pred_check
          %p171 = pneg %p103
        $region22: #{tpu_custom_call.1} parent=11 // pred_check_branch
          %173 = sbr.rel (%p171) target = $region24
        $region23: #{tpu_custom_call.1} parent=11 // pred_region
          _
        $region24: #{tpu_custom_call.1} parent=11 // pred_fallthru
          _
        // Predicated region
        $region25: #{tpu_custom_call.1} parent=11 // pred_check
          %p174 = pneg %p124
        $region26: #{tpu_custom_call.1} parent=11 // pred_check_branch
          %176 = sbr.rel (%p174) target = $region28
        $region27: #{tpu_custom_call.1} parent=11 // pred_region
          _
        $region28: #{tpu_custom_call.1} parent=11 // pred_fallthru
          _
      $region12: #{tpu_custom_call.1} parent=5 // pred_fallthru
        _
      %p177 = scmp.lt.s32.totalorder %s14, 2
      // Predicated region
      $region29: #{tpu_custom_call.1} parent=5 // pred_check
        %p178 = pneg %p177
      $region30: #{tpu_custom_call.1} parent=5 // pred_check_branch
        %180 = sbr.rel (%p178) target = $region32
      $region31: #{tpu_custom_call.1} parent=5 // pred_region
        // Predicated region
        $region33: #{tpu_custom_call.1} parent=31 // pred_check
          %p181 = pneg %p34
        $region34: #{tpu_custom_call.1} parent=31 // pred_check_branch
          %183 = sbr.rel (%p181) target = $region36
        $region35: #{tpu_custom_call.1} parent=31 // pred_region
          %p184 = scmp.lt.s32.totalorder %s14, 1
          %s185 = scalar_select %p184, %s14, 1
          %s186 = smul.addr %s185, 8
          %s187 = scalar_lea.vmem %s0, %s186
        $region36: #{tpu_custom_call.1} parent=31 // pred_fallthru
          _
      $region32: #{tpu_custom_call.1} parent=5 // pred_fallthru
        _
      %p188 = scmp.le.s32.totalorder 1, %s14
      %p189 = scmp.lt.s32.totalorder %s14, 3
      %p190 = pnand %p188, %p189
      %p191 = pneg %p190
      // Predicated region
      $region37: #{tpu_custom_call.1} parent=5 // pred_check
        _
      $region38: #{tpu_custom_call.1} parent=5 // pred_check_branch
        %193 = sbr.rel (%p190) target = $region40
      $region39: #{tpu_custom_call.1} parent=5 // pred_region
        %s194 = ssub.s32 %s14, 1
        %p195 = scmp.lt.s32.totalorder %s19, 1
        %s196 = scalar_select %p195, %s19, 1
        %s197 = smul.addr %s196, 8
        %s198 = scalar_lea.vmem %s0, %s197
        %p199 = pneg %p40
        %p200 = pneg %p37
        %p201 = pneg %p61
        %p202 = pneg %p58
        %p203 = pneg %p82
        %p204 = pneg %p79
        %p205 = pneg %p103
        %p206 = pneg %p100
        %p207 = pneg %p124
        %p208 = pneg %p121
        %p209 = pneg %p150
        %p210 = pneg %p147
        %s211 = sand.u32 %s137, 1
        %s212 = scalar_lea.sflag [#allocation3], %s211
        %s213 = sand.u32 %s137, 1
        %s214 = smul.addr %s213, 8
        %s215 = scalar_lea.vmem [#allocation2], %s214
        %p216 = scmp.lt.s32.totalorder %s19, 1
        %s217 = scalar_select %p216, %s19, 1
        %s218 = smul.addr %s217, 8
        %s219 = scalar_lea.vmem %s0, %s218
        %v220 = vld [vmem:[%s219] sm:$0xff]
        %v221 = vld [vmem:[%s1] sm:$0xff]
        %v222 = vld [vmem:[%s1 + $0x8] sm:$0xff]
        %v223 = vld [vmem:[%s1 + $0x10] sm:$0xff]
        %v224 = vld [vmem:[%s1 + $0x18] sm:$0xff]
        %v225 = vld [vmem:[%s2] sm:$0x1]
        %v227 = vlaneseq
        %v228 = vshrl.u32 %v227, 7
        %v229 = vsub.s32 0, %v228
        %v230 = vrot.slane %v225, %v229
        %vm232 = vcmask 261120
        %v234 = vsel %vm232, %v220, 0
        %236 = vmatprep.subr.mxu0 0.0
        %237 = vmatpush1.msra.mxu0 %v221
        %238 = vmatprep.subr.mxu0 0.0
        %239 = vmatpush1.msra.mxu0 %v222
        %240 = vmatprep.subr.mxu0 0.0
        %241 = vmatpush1.msra.mxu0 %v223
        %242 = vmatprep.subr.mxu0 0.0
        %243 = vmatpush1.msra.mxu0 %v224
        %244 = vmatprep.subr.mxu0 0.0
        %245 = vmatpush1.msra.mxu0 0.0
        %246 = vmatprep.subr.mxu0 0.0
        %247 = vmatpush1.msra.mxu0 0.0
        %248 = vmatprep.subr.mxu0 0.0
        %249 = vmatpush1.msra.mxu0 0.0
        %250 = vmatprep.subr.mxu0 0.0
        %251 = vmatpush1.msra.mxu0 0.0
        %252 = vmatprep.subr.mxu0 0.0
        %253 = vmatpush1.msra.mxu0 0.0
        %254 = vmatprep.subr.mxu0 0.0
        %255 = vmatpush1.msra.mxu0 0.0
        %256 = vmatprep.subr.mxu0 0.0
        %257 = vmatpush1.msra.mxu0 0.0
        %258 = vmatprep.subr.mxu0 0.0
        %259 = vmatpush1.msra.mxu0 0.0
        %260 = vmatprep.subr.mxu0 0.0
        %261 = vmatpush1.msra.mxu0 0.0
        %262 = vmatprep.subr.mxu0 0.0
        %263 = vmatpush1.msra.mxu0 0.0
        %264 = vmatprep.subr.mxu0 0.0
        %265 = vmatpush1.msra.mxu0 0.0
        %266 = vmatprep.subr.mxu0 0.0
        %267 = vmatpush1.msra.mxu0 0.0
        %268 = vmatprep.subr.mxu0 0.0
        %269 = vmatpush1.msra.mxu0 0.0
        %270 = vmatprep.subr.mxu0 0.0
        %271 = vmatpush1.msra.mxu0 0.0
        %272 = vmatprep.subr.mxu0 0.0
        %273 = vmatpush1.msra.mxu0 0.0
        %274 = vmatprep.subr.mxu0 0.0
        %275 = vmatpush1.msra.mxu0 0.0
        %276 = vmatprep.subr.mxu0 0.0
        %277 = vmatpush1.msra.mxu0 0.0
        %278 = vmatprep.subr.mxu0 0.0
        %279 = vmatpush1.msra.mxu0 0.0
        %280 = vmatprep.subr.mxu0 0.0
        %281 = vmatpush1.msra.mxu0 0.0
        %282 = vmatprep.subr.mxu0 0.0
        %283 = vmatpush1.msra.mxu0 0.0
        %284 = vmatprep.subr.mxu0 0.0
        %285 = vmatpush1.msra.mxu0 0.0
        %286 = vmatprep.subr.mxu0 0.0
        %287 = vmatpush1.msra.mxu0 0.0
        %288 = vmatprep.subr.mxu0 0.0
        %289 = vmatpush1.msra.mxu0 0.0
        %290 = vmatprep.subr.mxu0 0.0
        %291 = vmatpush1.msra.mxu0 0.0
        %292 = vmatprep.subr.mxu0 0.0
        %293 = vmatpush1.msra.mxu0 0.0
        %294 = vmatprep.subr.mxu0 0.0
        %295 = vmatpush1.msra.mxu0 0.0
        %296 = vmatprep.subr.mxu0 0.0
        %297 = vmatpush1.msra.mxu0 0.0
        %298 = vmatprep.subr.mxu0 0.0
        %299 = vmatpush1.msra.mxu0 0.0
        %300 = vmatprep.mubr.f32.mxu0 0.0
        %301 = vmatmul.mubr.f32.gmra.mrb[0].mxu0 %v234
        %v302 = vpop.f32.mrb[0].mxu0
        %v303 = vadd.f32 %v230, %v302
        %v304 = vpop.f32.mrb[0].mxu0
        %305 = vdwg.mxu0
        %vm306 = vcmp.gt.f32.partialorder %v303, 0.0
        %v307 = vmul.f32 %v303, 0.01
        %v308 = vsel %vm306, %v303, %v307
        %v309 = vld [vmem:[%s3] sm:$0xf]
        %v310 = vld [vmem:[%s4] sm:$0x1]
        %v312 = vlaneseq
        %v313 = vshrl.u32 %v312, 7
        %v314 = vsub.s32 0, %v313
        %v315 = vrot.slane %v310, %v314
        %318 = vset.pattern.permute.xlu0 0
        %319 = vperm.xlu0 %318, %v308
        %v320 = vpop.permute.xlu0 %319
        %v322 = vlaneseq
        %v323 = vshrl.u32 %v322, 7
        %v324 = vsub.s32 0, %v323
        %v325 = vrot.slane %v309, %v324
        %v326 = vmul.f32 %v320, %v325
        %v327 = vadd.f32 %v315, %v326
        %328 = vset.pattern.permute.xlu0 1
        %329 = vperm.xlu0 %328, %v308
        %v330 = vpop.permute.xlu0 %329
        %v332 = vlaneseq
        %v333 = vshrl.u32 %v332, 7
        %v334 = vsub.s32 1, %v333
        %v335 = vrot.slane %v309, %v334
        %v336 = vmul.f32 %v330, %v335
        %v337 = vadd.f32 %v327, %v336
        %338 = vset.pattern.permute.xlu0 2
        %339 = vperm.xlu0 %338, %v308
        %v340 = vpop.permute.xlu0 %339
        %v342 = vlaneseq
        %v343 = vshrl.u32 %v342, 7
        %v344 = vsub.s32 2, %v343
        %v345 = vrot.slane %v309, %v344
        %v346 = vmul.f32 %v340, %v345
        %v347 = vadd.f32 %v337, %v346
        %348 = vset.pattern.permute.xlu0 3
        %349 = vperm.xlu0 %348, %v308
        %v350 = vpop.permute.xlu0 %349
        %v352 = vlaneseq
        %v353 = vshrl.u32 %v352, 7
        %v354 = vsub.s32 3, %v353
        %v355 = vrot.slane %v309, %v354
        %v356 = vmul.f32 %v350, %v355
        %v357 = vadd.f32 %v347, %v356
        %358 = vst [vmem:[%s215] sm:$0xff] %v357
        %s359 = sand.u32 %s137, 1
        %s360 = scalar_lea.sflag [#allocation3], %s359
        %s361 = sand.u32 %s137, 1
        %s362 = smul.addr %s361, 8
        %s363 = scalar_lea.vmem [#allocation2], %s362
        // Predicated region
        $region41: #{tpu_custom_call.1} parent=39 // pred_check
          %p364 = pneg %p147
        $region42: #{tpu_custom_call.1} parent=39 // pred_check_branch
          %366 = sbr.rel (%p364) target = $region44
        $region43: #{tpu_custom_call.1} parent=39 // pred_region
          %s368 = ssub.s32 128, 128
          %369 = vsyncadd %s360, %s368
          %s370 = smul.addr %s19, 128
          %s371 = scalar_lea.hbm %s5, %s370
          %s373 = sshll.u32 %s363, 4
          %s374 = int_to_ptr.vmem [resolvable:$true] %s373
          %376 = dma.vmem_to_hbm [thread:$0]  %s374, 128, %s371, %s360
        $region44: #{tpu_custom_call.1} parent=39 // pred_fallthru
          _
      $region40: #{tpu_custom_call.1} parent=5 // pred_fallthru
        _
      %p377 = scmp.le.s32.totalorder 2, %s14
      // Predicated region
      $region45: #{tpu_custom_call.1} parent=5 // pred_check
        %p378 = pneg %p377
      $region46: #{tpu_custom_call.1} parent=5 // pred_check_branch
        %380 = sbr.rel (%p378) target = $region48
      $region47: #{tpu_custom_call.1} parent=5 // pred_region
        %s381 = ssub.s32 %s14, 2
        // Predicated region
        $region49: #{tpu_custom_call.1} parent=47 // pred_check
          %p382 = pneg %p153
        $region50: #{tpu_custom_call.1} parent=47 // pred_check_branch
          %384 = sbr.rel (%p382) target = $region52
        $region51: #{tpu_custom_call.1} parent=47 // pred_region
          %s385 = sand.u32 %s138, 1
          %s386 = scalar_lea.sflag [#allocation3], %s385
          %s387 = sand.u32 %s138, 1
          %s388 = smul.addr %s387, 8
          %s389 = scalar_lea.vmem [#allocation2], %s388
          %390 = dma.done %s386, 128
        $region52: #{tpu_custom_call.1} parent=47 // pred_fallthru
          _
      $region48: #{tpu_custom_call.1} parent=5 // pred_fallthru
        _
    $region6: #{tpu_custom_call.1} parent=1 // loop_footer
      %s18 = sadd.s32 1, %s14
    $region7: #{tpu_custom_call.1} parent=1 // loop_footer_branch
      %13 = sbr.rel target = $region3
    $region8: #{tpu_custom_call.1} parent=1 // loop_exit
      _
    %391 = vsyncpa [#allocation3], 1
    %s392 = scalar_lea.sflag [#allocation3], 1
    %393 = vsyncpa %s392, 1

</llo_original>
